<compile_context>
chip_gen: v5e
topology: v5e:2x2
jax: 0.10.0
libtpu: 0.0.40
codegen_flags: <defaults>
</compile_context>

<pallas_src>
import functools
import math

import numpy as np
import jax
import jax.numpy as jnp
from jax import lax
from jax.experimental import pallas as pl
from jax.experimental.pallas import tpu as pltpu


# ---------------------------------------------------------------------------
# Rotation operator buffer (host-side numpy; mirrors MultiRotationOperatorMatrix)
# ---------------------------------------------------------------------------
def _rotation_operator_matrix(k, theta, disk_mask=True):
    """[k*k, k*k] bilinear-interpolation rotation operator (with disk mask)."""
    c = (k - 1) / 2.0
    radius = c + 0.5
    R = np.zeros((k * k, k * k), dtype=np.float64)
    ct, st = math.cos(theta), math.sin(theta)
    for i in range(k):            # target row
        for j in range(k):        # target col
            yi, xj = i - c, j - c
            if disk_mask and math.hypot(yi, xj) > radius:
                continue          # disk mask: zero row
            # inverse-rotate the target coordinate to find the source sample
            ys = ct * yi + st * xj + c
            xs = -st * yi + ct * xj + c
            y0, x0 = math.floor(ys), math.floor(xs)
            dy, dx = ys - y0, xs - x0
            for yy, wy in ((y0, 1.0 - dy), (y0 + 1, dy)):
                for xx, wx in ((x0, 1.0 - dx), (x0 + 1, dx)):
                    if 0 <= yy < k and 0 <= xx < k and wy * wx != 0.0:
                        R[i * k + j, yy * k + xx] += wy * wx
    return R


def multi_rotation_operator_matrix(nx, ny, num_theta, diskMask=True):
    assert nx == ny
    return np.stack(
        [_rotation_operator_matrix(nx, 2.0 * math.pi * t / num_theta, diskMask)
         for t in range(num_theta)], axis=0)          # [T, k*k, k*k]


def _round_up(a, b):
    return -(-a // b) * b


# ---------------------------------------------------------------------------
# Pallas kernel: build the im2col operand in VMEM, one lane-dense MXU matmul
# ---------------------------------------------------------------------------
def _lifting_conv_kernel(xa_ref, xb_ref, w_ref, b_ref, o_ref, *,
                         K, W_store, TS, KKC, KKC_pad):
    # xa_ref : (CIN_g, TS)      bf16  current flat row-tile of the padded input
    # xb_ref : (CIN_g, TS)      bf16  next row-tile (halo)
    # w_ref  : (OT_g, KKC_pad)  bf16  rotated kernel stack, tap-major columns
    # b_ref  : (OT_g, 1)        f32   bias (repeated over theta)
    # o_ref  : (OT_g, TS)             lane-dense output tile (TS % 128 == 0)
    slab = jnp.concatenate([xa_ref[...], xb_ref[...]], axis=-1)   # (CIN_g, 2*TS)
    taps = []
    for ky in range(K):
        for kx in range(K):
            off = ky * W_store + kx
            taps.append(slab[:, off:off + TS])                    # (CIN_g, TS)
    if KKC_pad > KKC:
        taps.append(jnp.zeros((KKC_pad - KKC, TS), slab.dtype))   # sublane pad
    p = jnp.concatenate(taps, axis=0)                             # (KKC_pad, TS)
    acc = jnp.dot(w_ref[...], p, preferred_element_type=jnp.float32)
    acc = acc + b_ref[...]                                        # f32 epilogue
    o_ref[...] = acc.astype(o_ref.dtype)


def _pick_row_tile(HO, W_store, K, *, per_lane_bytes, vmem_budget,
                   lane_target=2048):
    """Output-row tile TR such that TS = TR*W_store is a multiple of 128."""
    tr_align = 128 // math.gcd(W_store, 128)
    tr_min = _round_up(max(K, tr_align), tr_align)   # must cover the K-row halo
    lanes_cap = min(lane_target,
                    max(tr_min * W_store, vmem_budget // max(per_lane_bytes, 1)))
    tr = max(tr_min, (lanes_cap // W_store) // tr_align * tr_align)
    tr = min(tr, max(tr_min, _round_up(HO, tr_align)))
    # prefer >= 2 spatial tiles so both v7x TensorCores get work even at batch 1
    while tr > tr_min and _round_up(HO, tr) // tr < 2:
        tr = max(tr_min, _round_up(tr // 2, tr_align))
    ho_pad = _round_up(HO, tr)
    return tr, ho_pad


def lifting_conv2d_pallas(x, w_stack, bias_full, *, kernel_size, padding, stride,
                          groups, out_dtype=None, vmem_budget=24 * 1024 * 1024):
    """Grouped conv2d for the SE(2) lifting layer.

    x: (N, CIN, H, W);  w_stack: (O*T, CIN/groups, K, K);  bias_full: (O*T,)
    returns (N, O*T, HO, WO).
    """
    N, CIN, H, W = x.shape
    OT, CIN_g, K, _ = w_stack.shape
    assert kernel_size == K and CIN_g * groups == CIN and OT % groups == 0
    out_dtype = x.dtype if out_dtype is None else out_dtype
    OT_g = OT // groups

    # stride-1 output extents; stride > 1 handled by subsampling afterwards.
    HO1 = H + 2 * padding - K + 1
    WO1 = W + 2 * padding - K + 1
    assert HO1 >= 1 and WO1 >= 1

    KKC = K * K * CIN_g
    KKC_pad = _round_up(KKC, 16)                 # bf16 sublane packing
    out_bytes = jnp.dtype(out_dtype).itemsize

    # Storage width: multiple of 16 so small row tiles already give 128-aligned lanes.
    W_store = _round_up(W + 2 * padding, 16)

    # Rough per-output-lane VMEM bytes (double-buffered inputs/outputs + temps).
    per_lane = (2 * 2 * CIN_g * 2                # two input specs, dbl-buffered, bf16
                + 2 * OT_g * out_bytes           # output, dbl-buffered
                + KKC_pad * 2                    # im2col operand (VMEM temp)
                + OT_g * 4)                      # f32 accumulator temp
    TR, HO_pad = _pick_row_tile(HO1, W_store, K,
                                per_lane_bytes=per_lane, vmem_budget=vmem_budget)
    TS = TR * W_store                            # lane-dense: TS % 128 == 0
    rows_total = HO_pad + TR                     # one extra (zero) row tile = halo
    n_tiles = HO_pad // TR

    # ---- pad + flatten the input ONCE, in bf16 (no K^2 im2col blow-up) ----
    xb = x.astype(jnp.bfloat16)
    xb = jnp.pad(xb, ((0, 0), (0, 0),
                      (padding, rows_total - H - padding),
                      (padding, W_store - W - padding)))
    x_flat = xb.reshape(N, groups, CIN_g, rows_total * W_store)

    # ---- weights: tap-major columns (ky, kx, c), zero-padded to KKC_pad ----
    w2 = jnp.transpose(w_stack, (0, 2, 3, 1)).reshape(OT, KKC)
    w2 = jnp.pad(w2, ((0, 0), (0, KKC_pad - KKC)))
    w3 = w2.reshape(groups, OT_g, KKC_pad).astype(jnp.bfloat16)
    b3 = bias_full.reshape(groups, OT_g, 1).astype(jnp.float32)

    kernel = functools.partial(_lifting_conv_kernel, K=K, W_store=W_store,
                               TS=TS, KKC=KKC, KKC_pad=KKC_pad)

    # explicit VMEM cap: derived usage + headroom, kept under v7x's 64 MiB/TC
    est = per_lane * TS + 2 * OT_g * KKC_pad * 2 + OT_g * 4 + (1 << 20)
    vmem_limit = int(min(48 * 1024 * 1024, max(16 * 1024 * 1024, 2 * est)))

    y = pl.pallas_call(
        kernel,
        out_shape=jax.ShapeDtypeStruct((N, groups, OT_g, HO_pad * W_store),
                                       out_dtype),
        grid_spec=pltpu.PrefetchScalarGridSpec(
            num_scalar_prefetch=0,
            grid=(groups, N, n_tiles),
            in_specs=[
                # current row tile and its halo tile (same array, two specs)
                pl.BlockSpec((None, None, CIN_g, TS),
                             lambda g, n, s: (n, g, 0, s)),
                pl.BlockSpec((None, None, CIN_g, TS),
                             lambda g, n, s: (n, g, 0, s + 1)),
                # grid-invariant (per group) weight and bias
                pl.BlockSpec((None, OT_g, KKC_pad), lambda g, n, s: (g, 0, 0)),
                pl.BlockSpec((None, OT_g, 1), lambda g, n, s: (g, 0, 0)),
            ],
            out_specs=pl.BlockSpec((None, None, OT_g, TS),
                                   lambda g, n, s: (n, g, 0, s)),
        ),
        compiler_params=pltpu.CompilerParams(
            dimension_semantics=("parallel", "parallel", "parallel"),
            vmem_limit_bytes=vmem_limit),
    )(x_flat, x_flat, w3, b3)

    # un-pad: (N, G, OT_g, HO_pad*W_store) -> (N, OT, HO, WO)
    y = y.reshape(N, OT, HO_pad, W_store)[:, :, :HO1, :WO1]
    if stride > 1:
        y = y[:, :, ::stride, ::stride]
    return y


# ---------------------------------------------------------------------------
# Module wrapper (parameter setup + rotated-kernel construction = plain JAX glue)
# ---------------------------------------------------------------------------
class R2ToSE2ConvPallas:
    def __init__(self, input_dim, output_dim, num_theta, kernel_size,
                 padding=0, stride=1, bias=True, diskMask=True, groups=1, *, key):
        assert input_dim % groups == 0 and output_dim % groups == 0
        self.input_dim = input_dim
        self.output_dim = output_dim
        self.num_theta = num_theta
        self.kernel_size = kernel_size
        self.padding = padding
        self.stride = stride
        self.groups = groups
        std = 2.0 / math.sqrt(input_dim * kernel_size * kernel_size / groups)
        k_w, k_b = jax.random.split(key)
        self.kernel = std * jax.random.normal(
            k_w, (output_dim, input_dim // groups, kernel_size, kernel_size),
            jnp.float32)
        # Torch inits bias to zeros; use small non-zero values so the bias
        # broadcast path is exercised.
        self.bias = (0.1 * jax.random.normal(k_b, (output_dim,), jnp.float32)
                     if bias else None)
        self.RR = jnp.asarray(
            multi_rotation_operator_matrix(kernel_size, kernel_size, num_theta,
                                           diskMask), jnp.float32)

    def kernel_stack_conv2d(self):
        O, T, K = self.output_dim, self.num_theta, self.kernel_size
        cin_g = self.kernel.shape[1]
        k_flat = self.kernel.reshape(O, cin_g, K * K)
        stack = jnp.einsum('oix,tyx->otiy', k_flat, self.RR)   # [O, T, Cin/g, k*k]
        return stack.reshape(O * T, cin_g, K, K)

    def __call__(self, x):
        N = x.shape[0]
        O, T = self.output_dim, self.num_theta
        w = self.kernel_stack_conv2d()
        bias = self.bias if self.bias is not None else jnp.zeros((O,), jnp.float32)
        bias_full = jnp.repeat(bias, T)          # channel c = o*T + t -> bias[o]
        y = lifting_conv2d_pallas(x, w, bias_full,
                                  kernel_size=self.kernel_size,
                                  padding=self.padding, stride=self.stride,
                                  groups=self.groups)
        _, _, HO, WO = y.shape
        # (N, O*T, HO, WO) reshapes directly to (N, O, T, HO, WO) -- no transpose.
        return y.reshape(N, O, T, HO, WO)


# ---------------------------------------------------------------------------
# Pure-JAX reference (mirrors the PyTorch forward) for verification
# ---------------------------------------------------------------------------
def reference_forward(module, x):
    w = module.kernel_stack_conv2d()
    y = lax.conv_general_dilated(
        x, w, (module.stride, module.stride),
        [(module.padding, module.padding)] * 2,
        dimension_numbers=('NCHW', 'OIHW', 'NCHW'),
        feature_group_count=module.groups,
        precision=lax.Precision.HIGHEST)
    N, _, HO, WO = y.shape
    y = y.reshape(N, module.output_dim, module.num_theta, HO, WO)
    if module.bias is not None:
        y = y + module.bias[None, :, None, None, None]
    return y


if __name__ == "__main__":
    key = jax.random.PRNGKey(0)
    k_x1, k_p1, k_x2, k_p2 = jax.random.split(key, 4)

    # ---- test 1: stride 1, groups 1 (canonical lifting-conv shape) ----
    N, CIN, H, W = 2, 4, 16, 16
    OUT, T, K, P = 4, 8, 5, 2
    mod = R2ToSE2ConvPallas(CIN, OUT, T, K, padding=P, stride=1, bias=True,
                            diskMask=True, groups=1, key=k_p1)
    x = jax.random.normal(k_x1, (N, CIN, H, W), jnp.float32)
    y = jax.block_until_ready(mod(x))
    assert y.shape == (N, OUT, T, H, W), y.shape
    err = float(jnp.max(jnp.abs(y - reference_forward(mod, x))))
    # bf16 operands with f32 accumulation vs an f32-HIGHEST reference over a
    # contraction of K*K*CIN = 100 -> expected max abs err ~1e-2..3e-2; 6e-2
    # still catches structural/ordering bugs (which give O(1) errors).
    assert err < 6e-2, f"test1 max abs err {err}"

    # ---- test 2: stride 2, groups 2 (group grid axis + padding paths) ----
    N2, CIN2, H2, W2 = 2, 4, 12, 12
    OUT2, T2, K2, P2 = 4, 4, 3, 1
    mod2 = R2ToSE2ConvPallas(CIN2, OUT2, T2, K2, padding=P2, stride=2, bias=True,
                             diskMask=True, groups=2, key=k_p2)
    x2 = jax.random.normal(k_x2, (N2, CIN2, H2, W2), jnp.float32)
    y2 = jax.block_until_ready(mod2(x2))
    HO2 = (H2 + 2 * P2 - K2) // 2 + 1
    assert y2.shape == (N2, OUT2, T2, HO2, HO2), y2.shape
    err2 = float(jnp.max(jnp.abs(y2 - reference_forward(mod2, x2))))
    assert err2 < 6e-2, f"test2 max abs err {err2}"

    print("KERNEL_OK")
</pallas_src>

<mosaic_0001>
module attributes {stable_mosaic.version = 11 : i64} {
  func.func @_lifting_conv_kernel(%arg0: i32, %arg1: i32, %arg2: i32, %arg3: memref<1x1x4x256xbf16, #tpu.memory_space<vmem>>, %arg4: memref<1x1x4x256xbf16, #tpu.memory_space<vmem>>, %arg5: memref<1x32x112xbf16, #tpu.memory_space<vmem>>, %arg6: memref<1x32x1xf32, #tpu.memory_space<vmem>>, %arg7: memref<1x1x32x256xf32, #tpu.memory_space<vmem>>) attributes {dimension_semantics = [#tpu.dimension_semantics<parallel>, #tpu.dimension_semantics<parallel>, #tpu.dimension_semantics<parallel>], iteration_bounds = array<i64: 1, 2, 2>, scalar_prefetch = 0 : i64, scratch_operands = 0 : i64, tpu.core_type = #tpu.core_type<tc>, window_params = [{transform_indices = @transform_0, window_bounds = array<i64: 1, 1, 4, 256>}, {transform_indices = @transform_1, window_bounds = array<i64: 1, 1, 4, 256>}, {transform_indices = @transform_2, window_bounds = array<i64: 1, 32, 112>}, {transform_indices = @transform_3, window_bounds = array<i64: 1, 32, 1>}, {transform_indices = @transform_4, window_bounds = array<i64: 1, 1, 32, 256>}]} {
    %c0 = arith.constant 0 : index
    %c0_0 = arith.constant 0 : index
    %c0_1 = arith.constant 0 : index
    %c0_2 = arith.constant 0 : index
    %0 = vector.load %arg3[%c0, %c0_0, %c0_1, %c0_2] : memref<1x1x4x256xbf16, #tpu.memory_space<vmem>>, vector<1x1x4x256xbf16>
    %1 = vector.shape_cast %0 : vector<1x1x4x256xbf16> to vector<4x256xbf16>
    %c0_3 = arith.constant 0 : index
    %c0_4 = arith.constant 0 : index
    %c0_5 = arith.constant 0 : index
    %c0_6 = arith.constant 0 : index
    %2 = vector.load %arg4[%c0_3, %c0_4, %c0_5, %c0_6] : memref<1x1x4x256xbf16, #tpu.memory_space<vmem>>, vector<1x1x4x256xbf16>
    %3 = vector.shape_cast %2 : vector<1x1x4x256xbf16> to vector<4x256xbf16>
    %4 = tpu.concatenate %1, %3 in 1 : vector<4x256xbf16>, vector<4x256xbf16> -> vector<4x512xbf16>
    %5 = vector.extract_strided_slice %4 {offsets = [0, 0], sizes = [4, 256], strides = [1, 1]} : vector<4x512xbf16> to vector<4x256xbf16>
    %6 = vector.extract_strided_slice %4 {offsets = [0, 1], sizes = [4, 256], strides = [1, 1]} : vector<4x512xbf16> to vector<4x256xbf16>
    %7 = vector.extract_strided_slice %4 {offsets = [0, 2], sizes = [4, 256], strides = [1, 1]} : vector<4x512xbf16> to vector<4x256xbf16>
    %8 = vector.extract_strided_slice %4 {offsets = [0, 3], sizes = [4, 256], strides = [1, 1]} : vector<4x512xbf16> to vector<4x256xbf16>
    %9 = vector.extract_strided_slice %4 {offsets = [0, 4], sizes = [4, 256], strides = [1, 1]} : vector<4x512xbf16> to vector<4x256xbf16>
    %10 = vector.extract_strided_slice %4 {offsets = [0, 32], sizes = [4, 256], strides = [1, 1]} : vector<4x512xbf16> to vector<4x256xbf16>
    %11 = vector.extract_strided_slice %4 {offsets = [0, 33], sizes = [4, 256], strides = [1, 1]} : vector<4x512xbf16> to vector<4x256xbf16>
    %12 = vector.extract_strided_slice %4 {offsets = [0, 34], sizes = [4, 256], strides = [1, 1]} : vector<4x512xbf16> to vector<4x256xbf16>
    %13 = vector.extract_strided_slice %4 {offsets = [0, 35], sizes = [4, 256], strides = [1, 1]} : vector<4x512xbf16> to vector<4x256xbf16>
    %14 = vector.extract_strided_slice %4 {offsets = [0, 36], sizes = [4, 256], strides = [1, 1]} : vector<4x512xbf16> to vector<4x256xbf16>
    %15 = vector.extract_strided_slice %4 {offsets = [0, 64], sizes = [4, 256], strides = [1, 1]} : vector<4x512xbf16> to vector<4x256xbf16>
    %16 = vector.extract_strided_slice %4 {offsets = [0, 65], sizes = [4, 256], strides = [1, 1]} : vector<4x512xbf16> to vector<4x256xbf16>
    %17 = vector.extract_strided_slice %4 {offsets = [0, 66], sizes = [4, 256], strides = [1, 1]} : vector<4x512xbf16> to vector<4x256xbf16>
    %18 = vector.extract_strided_slice %4 {offsets = [0, 67], sizes = [4, 256], strides = [1, 1]} : vector<4x512xbf16> to vector<4x256xbf16>
    %19 = vector.extract_strided_slice %4 {offsets = [0, 68], sizes = [4, 256], strides = [1, 1]} : vector<4x512xbf16> to vector<4x256xbf16>
    %20 = vector.extract_strided_slice %4 {offsets = [0, 96], sizes = [4, 256], strides = [1, 1]} : vector<4x512xbf16> to vector<4x256xbf16>
    %21 = vector.extract_strided_slice %4 {offsets = [0, 97], sizes = [4, 256], strides = [1, 1]} : vector<4x512xbf16> to vector<4x256xbf16>
    %22 = vector.extract_strided_slice %4 {offsets = [0, 98], sizes = [4, 256], strides = [1, 1]} : vector<4x512xbf16> to vector<4x256xbf16>
    %23 = vector.extract_strided_slice %4 {offsets = [0, 99], sizes = [4, 256], strides = [1, 1]} : vector<4x512xbf16> to vector<4x256xbf16>
    %24 = vector.extract_strided_slice %4 {offsets = [0, 100], sizes = [4, 256], strides = [1, 1]} : vector<4x512xbf16> to vector<4x256xbf16>
    %25 = vector.extract_strided_slice %4 {offsets = [0, 128], sizes = [4, 256], strides = [1, 1]} : vector<4x512xbf16> to vector<4x256xbf16>
    %26 = vector.extract_strided_slice %4 {offsets = [0, 129], sizes = [4, 256], strides = [1, 1]} : vector<4x512xbf16> to vector<4x256xbf16>
    %27 = vector.extract_strided_slice %4 {offsets = [0, 130], sizes = [4, 256], strides = [1, 1]} : vector<4x512xbf16> to vector<4x256xbf16>
    %28 = vector.extract_strided_slice %4 {offsets = [0, 131], sizes = [4, 256], strides = [1, 1]} : vector<4x512xbf16> to vector<4x256xbf16>
    %29 = vector.extract_strided_slice %4 {offsets = [0, 132], sizes = [4, 256], strides = [1, 1]} : vector<4x512xbf16> to vector<4x256xbf16>
    %cst = arith.constant 0.000000e+00 : bf16
    %30 = vector.broadcast %cst : bf16 to vector<12x256xbf16>
    %31 = tpu.concatenate %5, %6, %7, %8, %9, %10, %11, %12, %13, %14, %15, %16, %17, %18, %19, %20 in 0 : vector<4x256xbf16>, vector<4x256xbf16>, vector<4x256xbf16>, vector<4x256xbf16>, vector<4x256xbf16>, vector<4x256xbf16>, vector<4x256xbf16>, vector<4x256xbf16>, vector<4x256xbf16>, vector<4x256xbf16>, vector<4x256xbf16>, vector<4x256xbf16>, vector<4x256xbf16>, vector<4x256xbf16>, vector<4x256xbf16>, vector<4x256xbf16> -> vector<64x256xbf16>
    %32 = tpu.concatenate %21, %22, %23, %24, %25, %26, %27, %28, %29, %30 in 0 : vector<4x256xbf16>, vector<4x256xbf16>, vector<4x256xbf16>, vector<4x256xbf16>, vector<4x256xbf16>, vector<4x256xbf16>, vector<4x256xbf16>, vector<4x256xbf16>, vector<4x256xbf16>, vector<12x256xbf16> -> vector<48x256xbf16>
    %33 = tpu.concatenate %31, %32 in 0 : vector<64x256xbf16>, vector<48x256xbf16> -> vector<112x256xbf16>
    %c0_7 = arith.constant 0 : index
    %c0_8 = arith.constant 0 : index
    %c0_9 = arith.constant 0 : index
    %34 = vector.load %arg5[%c0_7, %c0_8, %c0_9] : memref<1x32x112xbf16, #tpu.memory_space<vmem>>, vector<1x32x112xbf16>
    %35 = vector.shape_cast %34 : vector<1x32x112xbf16> to vector<32x112xbf16>
    %cst_10 = arith.constant dense<0.000000e+00> : vector<32x256xf32>
    %36 = tpu.matmul %35, %33, %cst_10 {dimension_numbers = #tpu.dot_dimension_numbers<[1], [0], [0], [1], [0, 0, 1, 1], [], []>} : vector<32x112xbf16>, vector<112x256xbf16>, vector<32x256xf32> -> vector<32x256xf32>
    %c0_11 = arith.constant 0 : index
    %c0_12 = arith.constant 0 : index
    %c0_13 = arith.constant 0 : index
    %37 = vector.load %arg6[%c0_11, %c0_12, %c0_13] : memref<1x32x1xf32, #tpu.memory_space<vmem>>, vector<1x32x1xf32>
    %38 = vector.shape_cast %37 : vector<1x32x1xf32> to vector<32x1xf32>
    %39 = vector.broadcast %38 : vector<32x1xf32> to vector<32x256xf32>
    %40 = arith.addf %36, %39 : vector<32x256xf32>
    %c0_14 = arith.constant 0 : index
    %c0_15 = arith.constant 0 : index
    %c0_16 = arith.constant 0 : index
    %c0_17 = arith.constant 0 : index
    %41 = vector.load %arg7[%c0_14, %c0_15, %c0_16, %c0_17] : memref<1x1x32x256xf32, #tpu.memory_space<vmem>>, vector<1x1x32x256xf32>
    %42 = vector.shape_cast %41 : vector<1x1x32x256xf32> to vector<32x256xf32>
    %43 = vector.shape_cast %40 : vector<32x256xf32> to vector<1x1x32x256xf32>
    tpu.vector_store %arg7[%c0_14, %c0_15, %c0_16, %c0_17], %43 {strides = array<i32>} : memref<1x1x32x256xf32, #tpu.memory_space<vmem>>, vector<1x1x32x256xf32>,
    return
  }
  func.func @transform_0(%arg0: i32, %arg1: i32, %arg2: i32) -> (i32, i32, i32, i32) {
    %c0_i32 = arith.constant 0 : i32
    %c0_i32_0 = arith.constant 0 : i32
    return %arg1, %arg0, %c0_i32, %arg2 : i32, i32, i32, i32
  }
  func.func @transform_1(%arg0: i32, %arg1: i32, %arg2: i32) -> (i32, i32, i32, i32) {
    %c1_i32 = arith.constant 1 : i32
    %0 = arith.addi %arg2, %c1_i32 : i32
    %c0_i32 = arith.constant 0 : i32
    %c0_i32_0 = arith.constant 0 : i32
    return %arg1, %arg0, %c0_i32, %0 : i32, i32, i32, i32
  }
  func.func @transform_2(%arg0: i32, %arg1: i32, %arg2: i32) -> (i32, i32, i32) {
    %c0_i32 = arith.constant 0 : i32
    %c0_i32_0 = arith.constant 0 : i32
    %c0_i32_1 = arith.constant 0 : i32
    return %arg0, %c0_i32, %c0_i32_0 : i32, i32, i32
  }
  func.func @transform_3(%arg0: i32, %arg1: i32, %arg2: i32) -> (i32, i32, i32) {
    %c0_i32 = arith.constant 0 : i32
    %c0_i32_0 = arith.constant 0 : i32
    %c0_i32_1 = arith.constant 0 : i32
    return %arg0, %c0_i32, %c0_i32_0 : i32, i32, i32
  }
  func.func @transform_4(%arg0: i32, %arg1: i32, %arg2: i32) -> (i32, i32, i32, i32) {
    %c0_i32 = arith.constant 0 : i32
    %c0_i32_0 = arith.constant 0 : i32
    return %arg1, %arg0, %c0_i32, %arg2 : i32, i32, i32, i32
  }
}

</mosaic_0001>

<llo_original>
// kernel: tpu_custom_call.1
$region0: #{tpu_custom_call.1}
  #allocation0 [shape = 'u32[]', space=smem, size = 0x4, offset = 0x4, fixed_abs, tag = 'smem constant byte address 0x4 - core index']
  #allocation1 [shape = 'u32[72,128]{1,0:T(1,128)}', space=vmem, size = 0x9000, scoped, tag = 'internal scratch']
  %s0 = inlined_call_operand.vmem [shape: bf16[2,1,4,768], index: 0, kind: input, shape index: {}]
  %s1 = inlined_call_operand.hbm [shape: bf16[2,1,4,768], index: 1, kind: input, shape index: {}]
  %s2 = inlined_call_operand.hbm [shape: bf16[1,32,112], index: 2, kind: input, shape index: {}]
  %s3 = inlined_call_operand.vmem [shape: f32[1,32,1], index: 3, kind: input, shape index: {}]
  %s4 = inlined_call_operand.hbm [shape: f32[2,1,32,512], index: 4, kind: output, shape index: {}]
  %s5 = sld [smem:[#allocation0]]
  $region57: #{tpu_custom_call.1} parent=0
    _
  %s7 = ssub.s32 1, %s5
  %s8 = scalar_select 0, %s7, %s5
  $region1: #{tpu_custom_call.1} parent=0
    #allocation2 [shape = 'u8[4096]{0}', space=vmem, size = 0x1000, scoped, tag = 'input window, operand 1']
    #allocation3 [shape = 's32[2]{0}', space=sflag, size = 0x8, scoped, tag = 'scoped memory for tpu_custom_call.1']
    #allocation4 [shape = 's32[2]{0}', space=sflag, size = 0x8, scoped, tag = 'scoped memory for tpu_custom_call.1']
    #allocation5 [shape = 'u8[8192]{0}', space=vmem, size = 0x2000, scoped, tag = 'input window, operand 2, single buffered']
    #allocation6 [shape = 's32[1]{0}', space=sflag, size = 0x4, scoped, tag = 'scoped memory for tpu_custom_call.1']
    #allocation7 [shape = 'u8[65536]{0}', space=vmem, size = 0x10000, scoped, tag = 'output window, operand 0']
    %9 = vsyncpa [#allocation3], 0
    %s10 = scalar_lea.sflag [#allocation3], 1
    %11 = vsyncpa %s10, 0
    %12 = vsyncpa [#allocation6], 0
    %13 = vsyncpa [#allocation4], 0
    %s14 = scalar_lea.sflag [#allocation4], 1
    %15 = vsyncpa %s14, 0
    loop: start=0, step=1, limit=6
    $region2: #{tpu_custom_call.1} parent=1 // loop_pre_header
      _
    $region3: #{tpu_custom_call.1} parent=1 // loop_header
      %s17 = sphi 0, %s21
      %p18 = scmp.ge.s32.totalorder %s17, 6
      %s24 = sphi 0, %s43
      %s25 = sphi 0, %s39
      %s26 = sphi 0, %s35
      %s27 = sphi 0, %s24
      %s28 = sphi 0, %s25
      %s29 = sphi 0, %s26
      %s30 = sphi 0, %s27
      %s31 = sphi 0, %s28
      %s32 = sphi 0, %s29
      %s50 = sphi 0, %s52
      %s53 = sphi 0, %s50
      %s54 = sphi 0, %s53
      %s70 = sphi 0, %s54
      %s82 = sphi 0, %s84
      %s85 = sphi 0, %s82
      %s86 = sphi 0, %s85
      %s102 = sphi 0, %s86
      %s108 = sphi 0, %s110
      %s111 = sphi 0, %s108
      %s112 = sphi 0, %s111
      %s128 = sphi 0, %s112
      %s134 = sphi 0, %s136
      %s137 = sphi 0, %s134
      %s138 = sphi 0, %s137
      %s154 = sphi 0, %s138
      %s164 = sphi 0, %s166
      %s167 = sphi 0, %s164
      %s168 = sphi 0, %s167
      %s184 = sphi 0, %s168
    $region4: #{tpu_custom_call.1} parent=1 // loop_header_branch
      %20 = sbr.rel (%p18) target = $region8
    $region5: #{tpu_custom_call.1} parent=1 // loop_body
      %s22 = ssub.s32 %s17, 1
      %s23 = ssub.s32 %s17, 2
      %s33 = sadd.s32 1, %s26
      %p34 = scmp.ge.s32.totalorder %s33, 2
      %s35 = scalar_select %p34, 0, %s33
      %s36 = sadd.s32 1, %s25
      %s37 = scalar_select %p34, %s36, %s25
      %p38 = scmp.ge.s32.totalorder %s37, 2
      %s39 = scalar_select %p38, 0, %s37
      %s40 = sadd.s32 1, %s24
      %s41 = scalar_select %p38, %s40, %s24
      %p42 = scmp.ge.s32.totalorder %s41, 1
      %s43 = scalar_select %p42, 0, %s41
      %s44 = ssub.s32 %s25, %s39
      %s45 = ssub.s32 %s24, %s43
      %s46 = sor.u32 %s44, %s45
      %s47 = ssub.s32 %s26, %s35
      %s48 = sor.u32 %s46, %s47
      %p49 = scmp.eq.s32.totalorder %s48, 0
      %s51 = sadd.s32 %s50, 1
      %s52 = scalar_select %p49, %s50, %s51
      %p55 = pneg %p49
      %p56 = scmp.eq.s32.totalorder %s17, 3
      %p57 = por %p55, %p56
      %p58 = scmp.ne.s32.totalorder %s50, %s53
      %p59 = scmp.eq.s32.totalorder %s17, 0
      %p60 = por %p58, %p59
      %p61 = scmp.ne.s32.totalorder %s50, %s53
      %p62 = scmp.eq.s32.totalorder %s22, 3
      %p63 = por %p61, %p62
      %p64 = scmp.ne.s32.totalorder %s53, %s54
      %p65 = scmp.eq.s32.totalorder %s22, 0
      %p66 = por %p64, %p65
      %p67 = scmp.ne.s32.totalorder %s53, %s54
      %p68 = scmp.eq.s32.totalorder %s23, 3
      %p69 = por %p67, %p68
      %p71 = scmp.ne.s32.totalorder %s54, %s70
      %p72 = scmp.eq.s32.totalorder %s23, 0
      %p73 = por %p71, %p72
      %s74 = sadd.s32 %s26, 1
      %s75 = sadd.s32 %s35, 1
      %s76 = ssub.s32 %s25, %s39
      %s77 = ssub.s32 %s24, %s43
      %s78 = sor.u32 %s76, %s77
      %s79 = ssub.s32 %s74, %s75
      %s80 = sor.u32 %s78, %s79
      %p81 = scmp.eq.s32.totalorder %s80, 0
      %s83 = sadd.s32 %s82, 1
      %s84 = scalar_select %p81, %s82, %s83
      %p87 = pneg %p81
      %p88 = scmp.eq.s32.totalorder %s17, 3
      %p89 = por %p87, %p88
      %p90 = scmp.ne.s32.totalorder %s82, %s85
      %p91 = scmp.eq.s32.totalorder %s17, 0
      %p92 = por %p90, %p91
      %p93 = scmp.ne.s32.totalorder %s82, %s85
      %p94 = scmp.eq.s32.totalorder %s22, 3
      %p95 = por %p93, %p94
      %p96 = scmp.ne.s32.totalorder %s85, %s86
      %p97 = scmp.eq.s32.totalorder %s22, 0
      %p98 = por %p96, %p97
      %p99 = scmp.ne.s32.totalorder %s85, %s86
      %p100 = scmp.eq.s32.totalorder %s23, 3
      %p101 = por %p99, %p100
      %p103 = scmp.ne.s32.totalorder %s86, %s102
      %p104 = scmp.eq.s32.totalorder %s23, 0
      %p105 = por %p103, %p104
      %s106 = ssub.s32 %s24, %s43
      %p107 = scmp.eq.s32.totalorder %s106, 0
      %s109 = sadd.s32 %s108, 1
      %s110 = scalar_select %p107, %s108, %s109
      %p113 = pneg %p107
      %p114 = scmp.eq.s32.totalorder %s17, 3
      %p115 = por %p113, %p114
      %p116 = scmp.ne.s32.totalorder %s108, %s111
      %p117 = scmp.eq.s32.totalorder %s17, 0
      %p118 = por %p116, %p117
      %p119 = scmp.ne.s32.totalorder %s108, %s111
      %p120 = scmp.eq.s32.totalorder %s22, 3
      %p121 = por %p119, %p120
      %p122 = scmp.ne.s32.totalorder %s111, %s112
      %p123 = scmp.eq.s32.totalorder %s22, 0
      %p124 = por %p122, %p123
      %p125 = scmp.ne.s32.totalorder %s111, %s112
      %p126 = scmp.eq.s32.totalorder %s23, 3
      %p127 = por %p125, %p126
      %p129 = scmp.ne.s32.totalorder %s112, %s128
      %p130 = scmp.eq.s32.totalorder %s23, 0
      %p131 = por %p129, %p130
      %s132 = ssub.s32 %s24, %s43
      %p133 = scmp.eq.s32.totalorder %s132, 0
      %s135 = sadd.s32 %s134, 1
      %s136 = scalar_select %p133, %s134, %s135
      %p139 = pneg %p133
      %p140 = scmp.eq.s32.totalorder %s17, 3
      %p141 = por %p139, %p140
      %p142 = scmp.ne.s32.totalorder %s134, %s137
      %p143 = scmp.eq.s32.totalorder %s17, 0
      %p144 = por %p142, %p143
      %p145 = scmp.ne.s32.totalorder %s134, %s137
      %p146 = scmp.eq.s32.totalorder %s22, 3
      %p147 = por %p145, %p146
      %p148 = scmp.ne.s32.totalorder %s137, %s138
      %p149 = scmp.eq.s32.totalorder %s22, 0
      %p150 = por %p148, %p149
      %p151 = scmp.ne.s32.totalorder %s137, %s138
      %p152 = scmp.eq.s32.totalorder %s23, 3
      %p153 = por %p151, %p152
      %p155 = scmp.ne.s32.totalorder %s138, %s154
      %p156 = scmp.eq.s32.totalorder %s23, 0
      %p157 = por %p155, %p156
      %s158 = ssub.s32 %s25, %s39
      %s159 = ssub.s32 %s24, %s43
      %s160 = sor.u32 %s158, %s159
      %s161 = ssub.s32 %s26, %s35
      %s162 = sor.u32 %s160, %s161
      %p163 = scmp.eq.s32.totalorder %s162, 0
      %s165 = sadd.s32 %s164, 1
      %s166 = scalar_select %p163, %s164, %s165
      %p169 = pneg %p163
      %p170 = scmp.eq.s32.totalorder %s17, 3
      %p171 = por %p169, %p170
      %p172 = scmp.ne.s32.totalorder %s164, %s167
      %p173 = scmp.eq.s32.totalorder %s17, 0
      %p174 = por %p172, %p173
      %p175 = scmp.ne.s32.totalorder %s164, %s167
      %p176 = scmp.eq.s32.totalorder %s22, 3
      %p177 = por %p175, %p176
      %p178 = scmp.ne.s32.totalorder %s167, %s168
      %p179 = scmp.eq.s32.totalorder %s22, 0
      %p180 = por %p178, %p179
      %p181 = scmp.ne.s32.totalorder %s167, %s168
      %p182 = scmp.eq.s32.totalorder %s23, 3
      %p183 = por %p181, %p182
      %p185 = scmp.ne.s32.totalorder %s168, %s184
      %p186 = scmp.eq.s32.totalorder %s23, 0
      %p187 = por %p185, %p186
      %p188 = scmp.le.s32.totalorder 1, %s17
      %p189 = scmp.lt.s32.totalorder %s17, 5
      %p190 = pnand %p188, %p189
      %p191 = pneg %p190
      // Predicated region
      $region9: #{tpu_custom_call.1} parent=5 // pred_check
        _
      $region10: #{tpu_custom_call.1} parent=5 // pred_check_branch
        %193 = sbr.rel (%p190) target = $region12
      $region11: #{tpu_custom_call.1} parent=5 // pred_region
        %s194 = ssub.s32 %s17, 1
        // Predicated region
        $region13: #{tpu_custom_call.1} parent=11 // pred_check
          %p195 = pneg %p124
        $region14: #{tpu_custom_call.1} parent=11 // pred_check_branch
          %197 = sbr.rel (%p195) target = $region16
        $region15: #{tpu_custom_call.1} parent=11 // pred_region
          %199 = vsyncadd [#allocation6], 0
          %s200 = smul.addr %s27, 4
          %s201 = smul.addr %s200, 4
          %s202 = scalar_lea.hbm %s2, %s201
          %s203 = sshll.u32 %s202, 4
          %s204 = int_to_ptr.hbm [resolvable:$true] %s203
          %s205 = sshll.u32 [#allocation5], 4
          %s206 = int_to_ptr.vmem [resolvable:$true] %s205
          %211 = dma.hbm_to_vmem [thread:$0]  %s204, 256, %s206, [#allocation6], 64, 64, 4
        $region16: #{tpu_custom_call.1} parent=11 // pred_fallthru
          _
        // Predicated region
        $region17: #{tpu_custom_call.1} parent=11 // pred_check
          %p212 = pneg %p150
        $region18: #{tpu_custom_call.1} parent=11 // pred_check_branch
          %214 = sbr.rel (%p212) target = $region20
        $region19: #{tpu_custom_call.1} parent=11 // pred_region
          %p215 = scmp.lt.s32.totalorder %s27, 0
          %s216 = scalar_select %p215, %s27, 0
          %s217 = smul.addr %s216, 4
          %s218 = smul.addr %s217, 8
          %s219 = scalar_lea.vmem %s3, %s218
        $region20: #{tpu_custom_call.1} parent=11 // pred_fallthru
          _
      $region12: #{tpu_custom_call.1} parent=5 // pred_fallthru
        _
      %p220 = scmp.lt.s32.totalorder %s17, 4
      // Predicated region
      $region21: #{tpu_custom_call.1} parent=5 // pred_check
        %p221 = pneg %p220
      $region22: #{tpu_custom_call.1} parent=5 // pred_check_branch
        %223 = sbr.rel (%p221) target = $region24
      $region23: #{tpu_custom_call.1} parent=5 // pred_region
        // Predicated region
        $region25: #{tpu_custom_call.1} parent=23 // pred_check
          %p224 = pneg %p60
        $region26: #{tpu_custom_call.1} parent=23 // pred_check_branch
          %226 = sbr.rel (%p224) target = $region28
        $region27: #{tpu_custom_call.1} parent=23 // pred_region
          %s227 = smul.u32 2, %s26
          %p228 = scmp.lt.s32.totalorder %s25, 1
          %s229 = scalar_select %p228, %s25, 1
          %p230 = scmp.lt.s32.totalorder %s24, 0
          %s231 = scalar_select %p230, %s24, 0
          %p232 = scmp.lt.s32.totalorder %s227, 5
          %s233 = scalar_select %p232, %s227, 5
          %s234 = smul.addr %s231, 6
          %s235 = sadd.s32 %s233, %s234
          %s236 = smul.addr %s229, 6
          %s237 = sadd.s32 %s235, %s236
          %s238 = smul.addr %s237, 2
          %s239 = scalar_lea.vmem %s0, %s238
          %s240 = smul.u32 2, %s26
        $region28: #{tpu_custom_call.1} parent=23 // pred_fallthru
          _
        // Predicated region
        $region29: #{tpu_custom_call.1} parent=23 // pred_check
          %p241 = pneg %p92
        $region30: #{tpu_custom_call.1} parent=23 // pred_check_branch
          %243 = sbr.rel (%p241) target = $region32
        $region31: #{tpu_custom_call.1} parent=23 // pred_region
          %s244 = sand.u32 %s82, 1
          %s245 = scalar_lea.sflag [#allocation3], %s244
          %s246 = sand.u32 %s82, 1
          %s247 = smul.addr %s246, 4
          %s248 = scalar_lea.vmem [#allocation2], %s247
          %s249 = sadd.s32 %s26, 1
          %s250 = smul.u32 2, %s249
          %252 = vsyncadd %s245, 0
          %s253 = smul.addr %s24, 6
          %s254 = sadd.s32 %s250, %s253
          %s255 = smul.addr %s25, 6
          %s256 = sadd.s32 %s254, %s255
          %s257 = smul.addr %s256, 2
          %s258 = scalar_lea.hbm %s1, %s257
          %s260 = sshll.u32 %s258, 4
          %s261 = int_to_ptr.hbm [resolvable:$true] %s260
          %s262 = sshll.u32 %s248, 4
          %s263 = int_to_ptr.vmem [resolvable:$true] %s262
          %265 = dma.hbm_to_vmem [thread:$0]  %s261, 64, %s263, %s245
        $region32: #{tpu_custom_call.1} parent=23 // pred_fallthru
          _
      $region24: #{tpu_custom_call.1} parent=5 // pred_fallthru
        _
      %p266 = scmp.le.s32.totalorder 1, %s17
      %p267 = scmp.lt.s32.totalorder %s17, 5
      %p268 = pnand %p266, %p267
      %p269 = pneg %p268
      // Predicated region
      $region33: #{tpu_custom_call.1} parent=5 // pred_check
        _
      $region34: #{tpu_custom_call.1} parent=5 // pred_check_branch
        %271 = sbr.rel (%p268) target = $region36
      $region35: #{tpu_custom_call.1} parent=5 // pred_region
        %s272 = ssub.s32 %s17, 1
        %s273 = sand.u32 %s85, 1
        %s274 = scalar_lea.sflag [#allocation3], %s273
        %s275 = sand.u32 %s85, 1
        %s276 = smul.addr %s275, 4
        %s277 = scalar_lea.vmem [#allocation2], %s276
        // Predicated region
        $region37: #{tpu_custom_call.1} parent=35 // pred_check
          %p278 = pneg %p98
        $region38: #{tpu_custom_call.1} parent=35 // pred_check_branch
          %280 = sbr.rel (%p278) target = $region40
        $region39: #{tpu_custom_call.1} parent=35 // pred_region
          %282 = dma.done %s274, 64
        $region40: #{tpu_custom_call.1} parent=35 // pred_fallthru
          _
        // Predicated region
        $region41: #{tpu_custom_call.1} parent=35 // pred_check
          %p283 = pneg %p124
        $region42: #{tpu_custom_call.1} parent=35 // pred_check_branch
          %285 = sbr.rel (%p283) target = $region44
        $region43: #{tpu_custom_call.1} parent=35 // pred_region
          %287 = dma.done [#allocation6], 256
        $region44: #{tpu_custom_call.1} parent=35 // pred_fallthru
          _
        %s288 = smul.u32 2, %s29
        %p289 = scmp.lt.s32.totalorder %s28, 1
        %s290 = scalar_select %p289, %s28, 1
        %p291 = scmp.lt.s32.totalorder %s27, 0
        %s292 = scalar_select %p291, %s27, 0
        %p293 = scmp.lt.s32.totalorder %s288, 5
        %s294 = scalar_select %p293, %s288, 5
        %s295 = smul.addr %s292, 6
        %s296 = sadd.s32 %s294, %s295
        %s297 = smul.addr %s290, 6
        %s298 = sadd.s32 %s296, %s297
        %s299 = smul.addr %s298, 2
        %s300 = scalar_lea.vmem %s0, %s299
        %p301 = pneg %p66
        %p302 = pneg %p63
        %s303 = sand.u32 %s85, 1
        %s304 = scalar_lea.sflag [#allocation3], %s303
        %s305 = sand.u32 %s85, 1
        %s306 = smul.addr %s305, 4
        %s307 = scalar_lea.vmem [#allocation2], %s306
        %p308 = pneg %p98
        %p309 = pneg %p95
        %p310 = pneg %p124
        %p311 = pneg %p121
        %p312 = scmp.lt.s32.totalorder %s27, 0
        %s313 = scalar_select %p312, %s27, 0
        %s314 = smul.addr %s313, 4
        %s315 = smul.addr %s314, 8
        %s316 = scalar_lea.vmem %s3, %s315
        %p317 = pneg %p150
        %p318 = pneg %p147
        %p319 = pneg %p180
        %p320 = pneg %p177
        %s321 = sand.u32 %s167, 1
        %s322 = scalar_lea.sflag [#allocation4], %s321
        %s323 = sand.u32 %s167, 1
        %s324 = smul.addr %s323, 64
        %s325 = scalar_lea.vmem [#allocation7], %s324
        %s326 = smul.u32 2, %s29
        %p327 = scmp.lt.s32.totalorder %s28, 1
        %s328 = scalar_select %p327, %s28, 1
        %p329 = scmp.lt.s32.totalorder %s27, 0
        %s330 = scalar_select %p329, %s27, 0
        %p331 = scmp.lt.s32.totalorder %s326, 5
        %s332 = scalar_select %p331, %s326, 5
        %s333 = smul.addr %s330, 6
        %s334 = sadd.s32 %s332, %s333
        %s335 = smul.addr %s328, 6
        %s336 = sadd.s32 %s334, %s335
        %s337 = smul.addr %s336, 2
        %s338 = scalar_lea.vmem %s0, %s337
        %s339 = smul.u32 2, %s29
        %s340 = sadd.s32 %s29, 1
        %s341 = smul.u32 2, %s340
        %p342 = scmp.lt.s32.totalorder %s27, 0
        %s343 = scalar_select %p342, %s27, 0
        %s344 = smul.addr %s343, 4
        %s345 = smul.addr %s344, 8
        %s346 = scalar_lea.vmem %s3, %s345
        %s347 = smul.u32 2, %s29
        %v349 = vld [vmem:[%s338] sm:$0xf]
        %v350 = vld [vmem:[%s277] sm:$0xf]
        %352 = vst [vmem:[#allocation1] ss:$4 sm:$0xff] %v349
        %v353 = vld.sshfl [vmem:[#allocation1] sm:$0xff pattern:$0x73625140]
        %v355 = vld.sshfl [vmem:[#allocation1 + $0x8] sm:$0xff pattern:$0x73625140]
        %358 = vst [vmem:[#allocation1] ss:$4 sm:$0xff] %v350
        %v359 = vld.sshfl [vmem:[#allocation1] sm:$0xff pattern:$0x73625140]
        %v361 = vld.sshfl [vmem:[#allocation1 + $0x8] sm:$0xff pattern:$0x73625140]
        %v363 = vrot.slane %v353, 6
        %v364 = vrot.slane %v355, 6
        %v365 = vrot.slane %v359, 6
        %366 = vrot.lane.b32.xlu0 %v363, 127
        %v367 = vpop.permute.xlu0 %366
        %368 = vrot.lane.b32.xlu0 %v364, 127
        %v369 = vpop.permute.xlu0 %368
        %370 = vrot.lane.b32.xlu0 %v365, 127
        %v371 = vpop.permute.xlu0 %370
        %vm372 = vcmask 1039360
        %v373 = vsel %vm372, %v367, %v369
        %v374 = vsel %vm372, %v369, %v371
        %v375 = vrot.slane %v353, 4
        %v376 = vrot.slane %v355, 4
        %v377 = vrot.slane %v359, 4
        %378 = vrot.lane.b32.xlu0 %v375, 126
        %v379 = vpop.permute.xlu0 %378
        %380 = vrot.lane.b32.xlu0 %v376, 126
        %v381 = vpop.permute.xlu0 %380
        %382 = vrot.lane.b32.xlu0 %v377, 126
        %v383 = vpop.permute.xlu0 %382
        %vm384 = vcmask 1031168
        %v385 = vsel %vm384, %v379, %v381
        %v386 = vsel %vm384, %v381, %v383
        %v387 = vrot.slane %v353, 2
        %v388 = vrot.slane %v355, 2
        %v389 = vrot.slane %v359, 2
        %390 = vrot.lane.b32.xlu0 %v387, 125
        %v391 = vpop.permute.xlu0 %390
        %392 = vrot.lane.b32.xlu0 %v388, 125
        %v393 = vpop.permute.xlu0 %392
        %394 = vrot.lane.b32.xlu0 %v389, 125
        %v395 = vpop.permute.xlu0 %394
        %vm396 = vcmask 1022976
        %v397 = vsel %vm396, %v391, %v393
        %v398 = vsel %vm396, %v393, %v395
        %399 = vrot.lane.b32.xlu0 %v353, 124
        %v400 = vpop.permute.xlu0 %399
        %401 = vrot.lane.b32.xlu0 %v355, 124
        %v402 = vpop.permute.xlu0 %401
        %403 = vrot.lane.b32.xlu0 %v359, 124
        %v404 = vpop.permute.xlu0 %403
        %vm405 = vcmask 1014784
        %v406 = vsel %vm405, %v400, %v402
        %v407 = vsel %vm405, %v402, %v404
        %408 = vrot.lane.b32.xlu0 %v363, 96
        %v409 = vpop.permute.xlu0 %408
        %410 = vrot.lane.b32.xlu0 %v364, 96
        %v411 = vpop.permute.xlu0 %410
        %412 = vrot.lane.b32.xlu0 %v365, 96
        %v413 = vpop.permute.xlu0 %412
        %vm414 = vcmask 785408
        %v415 = vsel %vm414, %v409, %v411
        %v416 = vsel %vm414, %v411, %v413
        %417 = vrot.lane.b32.xlu0 %v375, 95
        %v418 = vpop.permute.xlu0 %417
        %419 = vrot.lane.b32.xlu0 %v376, 95
        %v420 = vpop.permute.xlu0 %419
        %421 = vrot.lane.b32.xlu0 %v377, 95
        %v422 = vpop.permute.xlu0 %421
        %vm423 = vcmask 777216
        %v424 = vsel %vm423, %v418, %v420
        %v425 = vsel %vm423, %v420, %v422
        %426 = vrot.lane.b32.xlu0 %v387, 94
        %v427 = vpop.permute.xlu0 %426
        %428 = vrot.lane.b32.xlu0 %v388, 94
        %v429 = vpop.permute.xlu0 %428
        %430 = vrot.lane.b32.xlu0 %v389, 94
        %v431 = vpop.permute.xlu0 %430
        %vm432 = vcmask 769024
        %v433 = vsel %vm432, %v427, %v429
        %v434 = vsel %vm432, %v429, %v431
        %435 = vrot.lane.b32.xlu0 %v353, 93
        %v436 = vpop.permute.xlu0 %435
        %437 = vrot.lane.b32.xlu0 %v355, 93
        %v438 = vpop.permute.xlu0 %437
        %439 = vrot.lane.b32.xlu0 %v359, 93
        %v440 = vpop.permute.xlu0 %439
        %vm441 = vcmask 760832
        %v442 = vsel %vm441, %v436, %v438
        %v443 = vsel %vm441, %v438, %v440
        %444 = vrot.lane.b32.xlu0 %v363, 92
        %v445 = vpop.permute.xlu0 %444
        %446 = vrot.lane.b32.xlu0 %v364, 92
        %v447 = vpop.permute.xlu0 %446
        %448 = vrot.lane.b32.xlu0 %v365, 92
        %v449 = vpop.permute.xlu0 %448
        %vm450 = vcmask 752640
        %v451 = vsel %vm450, %v445, %v447
        %v452 = vsel %vm450, %v447, %v449
        %453 = vrot.lane.b32.xlu0 %v375, 64
        %v454 = vpop.permute.xlu0 %453
        %455 = vrot.lane.b32.xlu0 %v376, 64
        %v456 = vpop.permute.xlu0 %455
        %457 = vrot.lane.b32.xlu0 %v377, 64
        %v458 = vpop.permute.xlu0 %457
        %vm459 = vcmask 523264
        %v460 = vsel %vm459, %v454, %v456
        %v461 = vsel %vm459, %v456, %v458
        %462 = vrot.lane.b32.xlu0 %v387, 63
        %v463 = vpop.permute.xlu0 %462
        %464 = vrot.lane.b32.xlu0 %v388, 63
        %v465 = vpop.permute.xlu0 %464
        %466 = vrot.lane.b32.xlu0 %v389, 63
        %v467 = vpop.permute.xlu0 %466
        %vm468 = vcmask 515072
        %v469 = vsel %vm468, %v463, %v465
        %v470 = vsel %vm468, %v465, %v467
        %471 = vrot.lane.b32.xlu0 %v353, 62
        %v472 = vpop.permute.xlu0 %471
        %473 = vrot.lane.b32.xlu0 %v355, 62
        %v474 = vpop.permute.xlu0 %473
        %475 = vrot.lane.b32.xlu0 %v359, 62
        %v476 = vpop.permute.xlu0 %475
        %vm477 = vcmask 506880
        %v478 = vsel %vm477, %v472, %v474
        %v479 = vsel %vm477, %v474, %v476
        %480 = vrot.lane.b32.xlu0 %v363, 61
        %v481 = vpop.permute.xlu0 %480
        %482 = vrot.lane.b32.xlu0 %v364, 61
        %v483 = vpop.permute.xlu0 %482
        %484 = vrot.lane.b32.xlu0 %v365, 61
        %v485 = vpop.permute.xlu0 %484
        %vm486 = vcmask 498688
        %v487 = vsel %vm486, %v481, %v483
        %v488 = vsel %vm486, %v483, %v485
        %489 = vrot.lane.b32.xlu0 %v375, 60
        %v490 = vpop.permute.xlu0 %489
        %491 = vrot.lane.b32.xlu0 %v376, 60
        %v492 = vpop.permute.xlu0 %491
        %493 = vrot.lane.b32.xlu0 %v377, 60
        %v494 = vpop.permute.xlu0 %493
        %vm495 = vcmask 490496
        %v496 = vsel %vm495, %v490, %v492
        %v497 = vsel %vm495, %v492, %v494
        %498 = vrot.lane.b32.xlu0 %v387, 32
        %v499 = vpop.permute.xlu0 %498
        %500 = vrot.lane.b32.xlu0 %v388, 32
        %v501 = vpop.permute.xlu0 %500
        %502 = vrot.lane.b32.xlu0 %v389, 32
        %v503 = vpop.permute.xlu0 %502
        %vm504 = vcmask 261120
        %v505 = vsel %vm504, %v499, %v501
        %v506 = vsel %vm504, %v501, %v503
        %vm507 = vcmask 1041408
        %v509 = vsel %vm507, %v353, %v373
        %v511 = vsel %vm507, %v355, %v374
        %vm512 = vcmask 1043456
        %v514 = vsel %vm512, %v509, %v385
        %v516 = vsel %vm512, %v511, %v386
        %vm517 = vcmask 1045504
        %v519 = vsel %vm517, %v514, %v397
        %v522 = vsel %vm517, %v516, %v398
        %v526 = vsel %vm507, %v406, %v415
        %v529 = vsel %vm507, %v407, %v416
        %v531 = vsel %vm512, %v526, %v424
        %v533 = vsel %vm512, %v529, %v425
        %v535 = vsel %vm517, %v531, %v433
        %v538 = vsel %vm517, %v533, %v434
        %v542 = vsel %vm507, %v442, %v451
        %v545 = vsel %vm507, %v443, %v452
        %v547 = vsel %vm512, %v542, %v460
        %v549 = vsel %vm512, %v545, %v461
        %v551 = vsel %vm517, %v547, %v469
        %v554 = vsel %vm517, %v549, %v470
        %v558 = vsel %vm507, %v478, %v487
        %v561 = vsel %vm507, %v479, %v488
        %v563 = vsel %vm512, %v558, %v496
        %v565 = vsel %vm512, %v561, %v497
        %v567 = vsel %vm517, %v563, %v505
        %v570 = vsel %vm517, %v565, %v506
        %572 = vrot.lane.b32.xlu0 %v355, 97
        %v573 = vpop.permute.xlu0 %572
        %574 = vrot.lane.b32.xlu0 %v359, 97
        %v575 = vpop.permute.xlu0 %574
        %vm576 = vcmask 793600
        %v577 = vsel %vm576, %v573, %v575
        %v578 = vrot.slane %v361, 6
        %579 = vrot.lane.b32.xlu0 %v578, 96
        %v580 = vpop.permute.xlu0 %579
        %v581 = vsel %vm414, %v413, %v580
        %v582 = vrot.slane %v361, 4
        %583 = vrot.lane.b32.xlu0 %v582, 95
        %v584 = vpop.permute.xlu0 %583
        %v585 = vsel %vm423, %v422, %v584
        %v586 = vrot.slane %v361, 2
        %587 = vrot.lane.b32.xlu0 %v586, 94
        %v588 = vpop.permute.xlu0 %587
        %v589 = vsel %vm432, %v431, %v588
        %590 = vrot.lane.b32.xlu0 %v361, 93
        %v591 = vpop.permute.xlu0 %590
        %v592 = vsel %vm441, %v440, %v591
        %v594 = vsel %vm507, %v359, %v371
        %v596 = vsel %vm512, %v594, %v383
        %v598 = vsel %vm517, %v596, %v395
        %v601 = vsel %vm507, %v573, %v411
        %v603 = vsel %vm507, %v577, %v416
        %v606 = vsel %vm507, %v575, %v581
        %v608 = vsel %vm512, %v601, %v420
        %v609 = vsel %vm512, %v603, %v425
        %v611 = vsel %vm512, %v606, %v585
        %v613 = vsel %vm517, %v608, %v429
        %v614 = vsel %vm517, %v609, %v434
        %v616 = vsel %vm517, %v611, %v589
        %v619 = vsel %vm507, %v438, 0
        %v620 = vsel %vm507, %v443, 0
        %v622 = vsel %vm507, %v592, 0
        %632 = vrot.lane.b32.xlu0 %v519, 31
        %v633 = vpop.permute.xlu0 %632
        %634 = vrot.lane.b32.xlu0 %v522, 31
        %v635 = vpop.permute.xlu0 %634
        %636 = vrot.lane.b32.xlu0 %v598, 31
        %v637 = vpop.permute.xlu0 %636
        %638 = vrot.lane.b32.xlu0 %v613, 31
        %v639 = vpop.permute.xlu0 %638
        %640 = vrot.lane.b32.xlu0 %v614, 31
        %v641 = vpop.permute.xlu0 %640
        %642 = vrot.lane.b32.xlu0 %v616, 31
        %v643 = vpop.permute.xlu0 %642
        %644 = vrot.lane.b32.xlu0 %v619, 31
        %v645 = vpop.permute.xlu0 %644
        %646 = vrot.lane.b32.xlu0 %v620, 31
        %v647 = vpop.permute.xlu0 %646
        %648 = vrot.lane.b32.xlu0 %v622, 31
        %v649 = vpop.permute.xlu0 %648
        %vm650 = vcmask 252928
        %v651 = vsel %vm650, %v633, %v635
        %v652 = vsel %vm650, %v635, %v637
        %v653 = vsel %vm650, %v639, %v641
        %v654 = vsel %vm650, %v641, %v643
        %v655 = vsel %vm650, %v645, %v647
        %v656 = vsel %vm650, %v647, %v649
        %v663 = vld [vmem:[#allocation5] sm:$0xf]
        %v664 = vld [vmem:[#allocation5 + $0x4] sm:$0xf]
        %v665 = vld [vmem:[#allocation5 + $0x8] sm:$0xf]
        %v666 = vld [vmem:[#allocation5 + $0xc] sm:$0xf]
        %v667 = vld [vmem:[%s346] sm:$0xff]
        %v668 = vld [vmem:[%s346 + $0x8] sm:$0xff]
        %v669 = vld [vmem:[%s346 + $0x10] sm:$0xff]
        %v670 = vld [vmem:[%s346 + $0x18] sm:$0xff]
        %672 = vset.pattern.permute.xlu0 0
        %673 = vperm.xlu0 %672, %v667
        %v674 = vpop.permute.xlu0 %673
        %677 = vset.pattern.permute.xlu0 0
        %678 = vperm.xlu0 %677, %v668
        %v679 = vpop.permute.xlu0 %678
        %682 = vset.pattern.permute.xlu0 0
        %683 = vperm.xlu0 %682, %v669
        %v684 = vpop.permute.xlu0 %683
        %687 = vset.pattern.permute.xlu0 0
        %688 = vperm.xlu0 %687, %v670
        %v689 = vpop.permute.xlu0 %688
        %v695 = vunpack.c.l.b16 %v663
        %v696 = vunpack.c.l.b16 %v664
        %v697 = vunpack.c.l.b16 %v665
        %v698 = vunpack.c.l.b16 %v666
        %v699 = vpack.c.b16 %v696, %v695
        %v700 = vpack.c.b16 %v698, %v697
        %vm701 = vcmask 916480
        %v703 = vsel %vm701, %v699, 0
        %v706 = vsel %vm701, %v700, 0
        %708 = vmatpush.bf16.msra.mxu0 0
        %709 = vmatpush.bf16.msra.mxu0 %v655
        %710 = vmatpush.bf16.msra.mxu0 %v653
        %711 = vmatpush.bf16.msra.mxu0 %v651
        %712 = vmatpush.bf16.msra.mxu0 %v567
        %713 = vmatpush.bf16.msra.mxu0 %v551
        %714 = vmatpush.bf16.msra.mxu0 %v535
        %715 = vmatpush.bf16.msra.mxu0 %v519
        %716 = vmatmul.bf16.gmra.mxu0 %v703
        %v717 = vpop.f32.mrf.mxu0
        %v718 = vadd.f32 %v674, %v717
        %v719 = vpop.f32.mrf.mxu0
        %v720 = vadd.f32 %v679, %v719
        %721 = vmatmul.bf16.gmra.mxu0 %v706
        %v722 = vpop.f32.mrf.mxu0
        %v723 = vadd.f32 %v684, %v722
        %v724 = vpop.f32.mrf.mxu0
        %v725 = vadd.f32 %v689, %v724
        %726 = vdwg.mxu0
        %727 = vmatpush.bf16.msra.mxu0 0
        %728 = vmatpush.bf16.msra.mxu0 %v656
        %729 = vmatpush.bf16.msra.mxu0 %v654
        %730 = vmatpush.bf16.msra.mxu0 %v652
        %731 = vmatpush.bf16.msra.mxu0 %v570
        %732 = vmatpush.bf16.msra.mxu0 %v554
        %733 = vmatpush.bf16.msra.mxu0 %v538
        %734 = vmatpush.bf16.msra.mxu0 %v522
        %735 = vmatmul.bf16.gmra.mxu0 %v703
        %v736 = vpop.f32.mrf.mxu0
        %v737 = vadd.f32 %v674, %v736
        %v738 = vpop.f32.mrf.mxu0
        %v739 = vadd.f32 %v679, %v738
        %740 = vmatmul.bf16.gmra.mxu0 %v706
        %v741 = vpop.f32.mrf.mxu0
        %v742 = vadd.f32 %v684, %v741
        %v743 = vpop.f32.mrf.mxu0
        %v744 = vadd.f32 %v689, %v743
        %745 = vdwg.mxu0
        %746 = vst [vmem:[%s325] sm:$0xff] %v718
        %747 = vst [vmem:[%s325 + $0x8] sm:$0xff] %v737
        %748 = vst [vmem:[%s325 + $0x10] sm:$0xff] %v720
        %749 = vst [vmem:[%s325 + $0x18] sm:$0xff] %v739
        %750 = vst [vmem:[%s325 + $0x20] sm:$0xff] %v723
        %751 = vst [vmem:[%s325 + $0x28] sm:$0xff] %v742
        %752 = vst [vmem:[%s325 + $0x30] sm:$0xff] %v725
        %753 = vst [vmem:[%s325 + $0x38] sm:$0xff] %v744
        %s754 = sand.u32 %s167, 1
        %s755 = scalar_lea.sflag [#allocation4], %s754
        %s756 = sand.u32 %s167, 1
        %s757 = smul.addr %s756, 64
        %s758 = scalar_lea.vmem [#allocation7], %s757
        // Predicated region
        $region45: #{tpu_custom_call.1} parent=35 // pred_check
          %p759 = pneg %p177
        $region46: #{tpu_custom_call.1} parent=35 // pred_check_branch
          %761 = sbr.rel (%p759) target = $region48
        $region47: #{tpu_custom_call.1} parent=35 // pred_region
          %s762 = smul.u32 2, %s29
          %764 = vsyncadd %s755, 0
          %s765 = smul.addr %s27, 16
          %s766 = sadd.s32 %s762, %s765
          %s767 = smul.addr %s28, 16
          %s768 = sadd.s32 %s766, %s767
          %s769 = smul.addr %s768, 8
          %s770 = scalar_lea.hbm %s4, %s769
          %s771 = sshll.u32 %s758, 4
          %s772 = int_to_ptr.vmem [resolvable:$true] %s771
          %s773 = sshll.u32 %s770, 4
          %s774 = int_to_ptr.hbm [resolvable:$true] %s773
          %779 = dma.vmem_to_hbm [thread:$0]  %s772, 1024, %s774, %s755, 256, 512, 16
        $region48: #{tpu_custom_call.1} parent=35 // pred_fallthru
          _
      $region36: #{tpu_custom_call.1} parent=5 // pred_fallthru
        _
      %p780 = scmp.le.s32.totalorder 2, %s17
      // Predicated region
      $region49: #{tpu_custom_call.1} parent=5 // pred_check
        %p781 = pneg %p780
      $region50: #{tpu_custom_call.1} parent=5 // pred_check_branch
        %783 = sbr.rel (%p781) target = $region52
      $region51: #{tpu_custom_call.1} parent=5 // pred_region
        %s784 = ssub.s32 %s17, 2
        // Predicated region
        $region53: #{tpu_custom_call.1} parent=51 // pred_check
          %p785 = pneg %p183
        $region54: #{tpu_custom_call.1} parent=51 // pred_check_branch
          %787 = sbr.rel (%p785) target = $region56
        $region55: #{tpu_custom_call.1} parent=51 // pred_region
          %s788 = sand.u32 %s168, 1
          %s789 = scalar_lea.sflag [#allocation4], %s788
          %s790 = sand.u32 %s168, 1
          %s791 = smul.addr %s790, 64
          %s792 = scalar_lea.vmem [#allocation7], %s791
          %794 = dma.done %s789, 1024
        $region56: #{tpu_custom_call.1} parent=51 // pred_fallthru
          _
      $region52: #{tpu_custom_call.1} parent=5 // pred_fallthru
        _
    $region6: #{tpu_custom_call.1} parent=1 // loop_footer
      %s21 = sadd.s32 1, %s17
    $region7: #{tpu_custom_call.1} parent=1 // loop_footer_branch
      %16 = sbr.rel target = $region3
    $region8: #{tpu_custom_call.1} parent=1 // loop_exit
      _
    %795 = vsyncpa [#allocation3], 1
    %s796 = scalar_lea.sflag [#allocation3], 1
    %797 = vsyncpa %s796, 1
    %798 = vsyncpa [#allocation6], 1
    %799 = vsyncpa [#allocation4], 1
    %s800 = scalar_lea.sflag [#allocation4], 1
    %801 = vsyncpa %s800, 1

</llo_original>
